<compile_context>
chip_gen: v5e
topology: v5e:2x2
jax: 0.10.0
libtpu: 0.0.40
codegen_flags: <defaults>
</compile_context>

<pallas_src>
import jax
import jax.numpy as jnp
import numpy as np
from jax.experimental import pallas as pl
from jax.experimental.pallas import tpu as pltpu

# ---------------------------------------------------------------------------
# Model hyper-parameters (small, consistent with the module's __init__)
# ---------------------------------------------------------------------------
B = 8            # batch
C = 4            # input channels
T = 16           # sequence length
D_IN = C * T     # flattened encoder input dim (64)
H_ENC = 32       # synthetic VAE encoder hidden dim
LATENT = 16      # vae_model.latent_dim
ENC_DIM = 2 * LATENT          # encoder_dim = latent_dim * 2 (32)
H_CLS = 32       # classifier hidden_dim
N_CLASSES = 2
BN_EPS = 1e-5

LANES = 128                  # padded output-lane width of every weight matrix
# Trimmed slab layout (rows, all starts 8-aligned):
#   [  0: 64)  we      (D_IN   x H_ENC, cols padded to 128)
#   [ 64: 96)  w_head  (H_ENC  x 2*LATENT, cols padded to 128)   = [wmu | wlv]
#   [ 96:128)  w1f     (ENC_DIM x H_CLS, BN folded, cols padded)
#   [128:160)  w2      (H_CLS  x N_CLASSES, cols padded)
#   [160:168)  biases  (rows: be, b_head, b1_folded, b2, then zero rows)
ROW_WE, ROW_WHEAD, ROW_W1F, ROW_W2, ROW_BIAS = 0, 64, 96, 128, 160
SLAB_ROWS = 168
OUT_W = 2 * LANES            # [logits_pad | feats_pad]
TB_MAX = 256                 # max batch tile (for large batches)


# ---------------------------------------------------------------------------
# Fused kernel: encoder + fused heads + (BN-folded) classifier
# ---------------------------------------------------------------------------
def tvae_classifier_kernel(x_ref, w_ref, out_ref):
    # x_ref:   [tb, 64]   flattened input (real width, no lane padding needed)
    # w_ref:   [168, 128] packed parameter slab (one DMA, resident across grid)
    # out_ref: [tb, 256]  lanes 0:128 -> logits_pad, 128:256 -> feats_pad
    x = x_ref[...]

    # Static row views into the packed slab (free slices, lane-dense loads).
    we      = w_ref[ROW_WE:ROW_WHEAD, :]      # [64, 128]
    w_head  = w_ref[ROW_WHEAD:ROW_W1F, :]     # [32, 128]  fused [wmu | wlv]
    w1f     = w_ref[ROW_W1F:ROW_W2, :]        # [32, 128]  fc1 with BN folded in
    w2      = w_ref[ROW_W2:ROW_BIAS, :]       # [32, 128]  fc2
    biases  = w_ref[ROW_BIAS:SLAB_ROWS, :]    # [8, 128]
    be      = biases[0:1, :]
    b_head  = biases[1:2, :]
    b1f     = biases[2:3, :]
    b2      = biases[3:4, :]

    # Synthetic VAE encoder: Linear -> ReLU          (K = 64)
    h = jnp.maximum(
        jnp.dot(x, we, preferred_element_type=jnp.float32) + be, 0.0)

    # Fused mu/logvar heads: one matmul              (K = 32)
    # feats = [mu | logvar] lives in lanes 0:ENC_DIM; padding lanes are zero.
    feats = jnp.dot(h[:, :H_ENC], w_head,
                    preferred_element_type=jnp.float32) + b_head

    # Classifier fc1 with BatchNorm(eval) folded in, then ReLU   (K = 32)
    # TODO(synk): Dropout is identity in eval mode; training-mode RNG mask not implemented.
    z = jnp.maximum(
        jnp.dot(feats[:, :ENC_DIM], w1f,
                preferred_element_type=jnp.float32) + b1f, 0.0)

    # Classifier fc2 -> logits (lanes 0:N_CLASSES, rest zero)    (K = 32)
    logits = jnp.dot(z[:, :H_CLS], w2,
                     preferred_element_type=jnp.float32) + b2

    # Single lane-dense output slab: two unmasked, 128-lane-aligned stores.
    out_ref[:, 0:LANES] = logits.astype(out_ref.dtype)
    out_ref[:, LANES:OUT_W] = feats.astype(out_ref.dtype)


# ---------------------------------------------------------------------------
# One-time parameter folding/packing (hoisted out of the per-call path)
# ---------------------------------------------------------------------------
def _pad2(a, rows, cols):
    r, c = a.shape
    return jnp.pad(a, ((0, rows - r), (0, cols - c)))


def pack_params(params):
    """Fold BN into fc1, fuse mu/logvar heads, pack everything into one
    [168, 128] f32 slab.  Call ONCE at init; pass the slab to the forward."""
    (we, be, wmu, bmu, wlv, blv, w1, b1, gamma, beta, mean, var, w2, b2) = params

    # Fuse mu / logvar heads into one matmul.
    w_head = jnp.concatenate([wmu, wlv], axis=1)          # [H_ENC, 2*LATENT]
    b_head = jnp.concatenate([bmu, blv], axis=1)          # [1, 2*LATENT]

    # Fold BatchNorm1d (eval, running stats) into fc1.
    s = gamma / jnp.sqrt(var + BN_EPS)                    # [1, H_CLS]
    w1f = w1 * s                                          # column scale
    b1f = (b1 - mean) * s + beta

    bias_block = jnp.concatenate(
        [
            _pad2(be, 1, LANES),
            _pad2(b_head, 1, LANES),
            _pad2(b1f, 1, LANES),
            _pad2(b2, 1, LANES),
        ],
        axis=0,
    )
    slab = jnp.concatenate(
        [
            _pad2(we, D_IN, LANES),          # rows   0: 64
            _pad2(w_head, H_ENC, LANES),     # rows  64: 96
            _pad2(w1f, ENC_DIM, LANES),      # rows  96:128
            _pad2(w2, H_CLS, LANES),         # rows 128:160
            _pad2(bias_block, 8, LANES),     # rows 160:168
        ],
        axis=0,
    )  # [168, 128]
    return slab


# ---------------------------------------------------------------------------
# Forward wrapper: batch tiling + pallas_call (slab is pre-packed)
# ---------------------------------------------------------------------------
@jax.jit
def tvae_classifier_forward(x, slab):
    """x: [B, C, T] f32, slab: [168, 128] f32 (from pack_params)
    -> (logits [B, N_CLASSES], features [B, ENC_DIM])."""
    b = x.shape[0]
    x_flat = x.reshape(b, -1)                              # NCL -> [B, D_IN]

    # Single block for small batches; 256-row tiles (parallel grid) otherwise.
    if b <= TB_MAX:
        tb = max(8, ((b + 7) // 8) * 8)
        b_pad = tb
    else:
        tb = TB_MAX
        b_pad = ((b + TB_MAX - 1) // TB_MAX) * TB_MAX
    x_pad = jnp.pad(x_flat, ((0, b_pad - b), (0, 0)))
    grid = (b_pad // tb,)

    out = pl.pallas_call(
        tvae_classifier_kernel,
        grid=grid,
        in_specs=[
            pl.BlockSpec((tb, D_IN), lambda i: (i, 0)),           # x tiles stream
            pl.BlockSpec((SLAB_ROWS, LANES), lambda i: (0, 0)),   # params resident
        ],
        out_specs=pl.BlockSpec((tb, OUT_W), lambda i: (i, 0)),    # fused output slab
        out_shape=jax.ShapeDtypeStruct((b_pad, OUT_W), jnp.float32),
        compiler_params=pltpu.CompilerParams(
            dimension_semantics=("parallel",),
        ),
    )(x_pad, slab)

    logits = out[:b, 0:N_CLASSES]
    feats = out[:b, LANES:LANES + ENC_DIM]
    return logits, feats


# ---------------------------------------------------------------------------
# Pure-JAX reference (unfused, unfolded) for correctness check
# ---------------------------------------------------------------------------
def reference_forward(x, params):
    (we, be, wmu, bmu, wlv, blv, w1, b1, gamma, beta, mean, var, w2, b2) = params
    xf = x.reshape(x.shape[0], -1)
    h = jnp.maximum(xf @ we + be, 0.0)
    mu = h @ wmu + bmu
    logvar = h @ wlv + blv
    feats = jnp.concatenate([mu, logvar], axis=1)
    z = feats @ w1 + b1
    z = (z - mean) / jnp.sqrt(var + BN_EPS) * gamma + beta
    z = jnp.maximum(z, 0.0)
    logits = z @ w2 + b2
    return logits, feats


def make_params(key):
    ks = jax.random.split(key, 12)
    scale = lambda fan_in: 1.0 / np.sqrt(fan_in)
    we = jax.random.normal(ks[0], (D_IN, H_ENC), jnp.float32) * scale(D_IN)
    be = jnp.zeros((1, H_ENC), jnp.float32)
    wmu = jax.random.normal(ks[1], (H_ENC, LATENT), jnp.float32) * scale(H_ENC)
    bmu = jnp.zeros((1, LATENT), jnp.float32)
    wlv = jax.random.normal(ks[2], (H_ENC, LATENT), jnp.float32) * scale(H_ENC)
    blv = jnp.zeros((1, LATENT), jnp.float32)
    w1 = jax.random.normal(ks[3], (ENC_DIM, H_CLS), jnp.float32) * scale(ENC_DIM)
    b1 = jax.random.normal(ks[4], (1, H_CLS), jnp.float32) * 0.01
    # Non-trivial BatchNorm running stats / affine to exercise the BN fold.
    gamma = 1.0 + 0.1 * jax.random.normal(ks[5], (1, H_CLS), jnp.float32)
    beta = 0.1 * jax.random.normal(ks[6], (1, H_CLS), jnp.float32)
    mean = 0.1 * jax.random.normal(ks[7], (1, H_CLS), jnp.float32)
    var = 1.0 + 0.1 * jnp.abs(jax.random.normal(ks[8], (1, H_CLS), jnp.float32))
    w2 = jax.random.normal(ks[9], (H_CLS, N_CLASSES), jnp.float32) * scale(H_CLS)
    b2 = jax.random.normal(ks[10], (1, N_CLASSES), jnp.float32) * 0.01
    return (we, be, wmu, bmu, wlv, blv, w1, b1, gamma, beta, mean, var, w2, b2)


if __name__ == "__main__":
    key = jax.random.PRNGKey(0)
    kx, kp = jax.random.split(key)
    x = jax.random.normal(kx, (B, C, T), jnp.float32)   # [batch, channels, time]
    params = make_params(kp)

    # Parameter packing happens ONCE, outside the per-call forward path.
    slab = jax.block_until_ready(pack_params(params))

    logits, feats = tvae_classifier_forward(x, slab)
    jax.block_until_ready((logits, feats))

    ref_logits, ref_feats = reference_forward(x, params)
    np.testing.assert_allclose(np.asarray(logits), np.asarray(ref_logits),
                               rtol=1e-4, atol=1e-5)
    np.testing.assert_allclose(np.asarray(feats), np.asarray(ref_feats),
                               rtol=1e-4, atol=1e-5)
    print("KERNEL_OK")
</pallas_src>

<mosaic_0001>
module attributes {stable_mosaic.version = 11 : i64} {
  func.func @tvae_classifier_kernel(%arg0: i32, %arg1: memref<8x64xf32, #tpu.memory_space<vmem>>, %arg2: memref<168x128xf32, #tpu.memory_space<vmem>>, %arg3: memref<8x256xf32, #tpu.memory_space<vmem>>) attributes {dimension_semantics = [#tpu.dimension_semantics<parallel>], iteration_bounds = array<i64: 1>, scalar_prefetch = 0 : i64, scratch_operands = 0 : i64, tpu.core_type = #tpu.core_type<tc>, window_params = [{transform_indices = @transform_0, window_bounds = array<i64: 8, 64>}, {pipeline_mode = #tpu.pipeline_mode<synchronous>, transform_indices = @transform_1, window_bounds = array<i64: 168, 128>}, {transform_indices = @transform_2, window_bounds = array<i64: 8, 256>}]} {
    %c0 = arith.constant 0 : index
    %c0_0 = arith.constant 0 : index
    %0 = vector.load %arg1[%c0, %c0_0] : memref<8x64xf32, #tpu.memory_space<vmem>>, vector<8x64xf32>
    %c0_1 = arith.constant 0 : index
    %c0_2 = arith.constant 0 : index
    %1 = vector.load %arg2[%c0_1, %c0_2] : memref<168x128xf32, #tpu.memory_space<vmem>>, vector<64x128xf32>
    %c64 = arith.constant 64 : index
    %c0_3 = arith.constant 0 : index
    %2 = vector.load %arg2[%c64, %c0_3] : memref<168x128xf32, #tpu.memory_space<vmem>>, vector<32x128xf32>
    %c96 = arith.constant 96 : index
    %c0_4 = arith.constant 0 : index
    %3 = vector.load %arg2[%c96, %c0_4] : memref<168x128xf32, #tpu.memory_space<vmem>>, vector<32x128xf32>
    %c128 = arith.constant 128 : index
    %c0_5 = arith.constant 0 : index
    %4 = vector.load %arg2[%c128, %c0_5] : memref<168x128xf32, #tpu.memory_space<vmem>>, vector<32x128xf32>
    %c160 = arith.constant 160 : index
    %c0_6 = arith.constant 0 : index
    %5 = vector.load %arg2[%c160, %c0_6] : memref<168x128xf32, #tpu.memory_space<vmem>>, vector<8x128xf32>
    %6 = vector.extract_strided_slice %5 {offsets = [0, 0], sizes = [1, 128], strides = [1, 1]} : vector<8x128xf32> to vector<1x128xf32>
    %7 = vector.extract_strided_slice %5 {offsets = [1, 0], sizes = [1, 128], strides = [1, 1]} : vector<8x128xf32> to vector<1x128xf32>
    %8 = vector.extract_strided_slice %5 {offsets = [2, 0], sizes = [1, 128], strides = [1, 1]} : vector<8x128xf32> to vector<1x128xf32>
    %9 = vector.extract_strided_slice %5 {offsets = [3, 0], sizes = [1, 128], strides = [1, 1]} : vector<8x128xf32> to vector<1x128xf32>
    %cst = arith.constant dense<0.000000e+00> : vector<8x128xf32>
    %10 = tpu.matmul %0, %1, %cst {dimension_numbers = #tpu.dot_dimension_numbers<[1], [0], [0], [1], [0, 0, 1, 1], [], []>} : vector<8x64xf32>, vector<64x128xf32>, vector<8x128xf32> -> vector<8x128xf32>
    %11 = vector.broadcast %6 : vector<1x128xf32> to vector<8x128xf32>
    %12 = arith.addf %10, %11 : vector<8x128xf32>
    %cst_7 = arith.constant 0.000000e+00 : f32
    %13 = vector.broadcast %cst_7 : f32 to vector<8x128xf32>
    %14 = arith.maximumf %12, %13 : vector<8x128xf32>
    %15 = vector.extract_strided_slice %14 {offsets = [0, 0], sizes = [8, 32], strides = [1, 1]} : vector<8x128xf32> to vector<8x32xf32>
    %cst_8 = arith.constant dense<0.000000e+00> : vector<8x128xf32>
    %16 = tpu.matmul %15, %2, %cst_8 {dimension_numbers = #tpu.dot_dimension_numbers<[1], [0], [0], [1], [0, 0, 1, 1], [], []>} : vector<8x32xf32>, vector<32x128xf32>, vector<8x128xf32> -> vector<8x128xf32>
    %17 = vector.broadcast %7 : vector<1x128xf32> to vector<8x128xf32>
    %18 = arith.addf %16, %17 : vector<8x128xf32>
    %19 = vector.extract_strided_slice %18 {offsets = [0, 0], sizes = [8, 32], strides = [1, 1]} : vector<8x128xf32> to vector<8x32xf32>
    %cst_9 = arith.constant dense<0.000000e+00> : vector<8x128xf32>
    %20 = tpu.matmul %19, %3, %cst_9 {dimension_numbers = #tpu.dot_dimension_numbers<[1], [0], [0], [1], [0, 0, 1, 1], [], []>} : vector<8x32xf32>, vector<32x128xf32>, vector<8x128xf32> -> vector<8x128xf32>
    %21 = vector.broadcast %8 : vector<1x128xf32> to vector<8x128xf32>
    %22 = arith.addf %20, %21 : vector<8x128xf32>
    %cst_10 = arith.constant 0.000000e+00 : f32
    %23 = vector.broadcast %cst_10 : f32 to vector<8x128xf32>
    %24 = arith.maximumf %22, %23 : vector<8x128xf32>
    %25 = vector.extract_strided_slice %24 {offsets = [0, 0], sizes = [8, 32], strides = [1, 1]} : vector<8x128xf32> to vector<8x32xf32>
    %cst_11 = arith.constant dense<0.000000e+00> : vector<8x128xf32>
    %26 = tpu.matmul %25, %4, %cst_11 {dimension_numbers = #tpu.dot_dimension_numbers<[1], [0], [0], [1], [0, 0, 1, 1], [], []>} : vector<8x32xf32>, vector<32x128xf32>, vector<8x128xf32> -> vector<8x128xf32>
    %27 = vector.broadcast %9 : vector<1x128xf32> to vector<8x128xf32>
    %28 = arith.addf %26, %27 : vector<8x128xf32>
    %c0_12 = arith.constant 0 : index
    %c0_13 = arith.constant 0 : index
    %29 = vector.load %arg3[%c0_12, %c0_13] : memref<8x256xf32, #tpu.memory_space<vmem>>, vector<8x128xf32>
    tpu.vector_store %arg3[%c0_12, %c0_13], %28 {strides = array<i32>} : memref<8x256xf32, #tpu.memory_space<vmem>>, vector<8x128xf32>,
    %c0_14 = arith.constant 0 : index
    %c128_15 = arith.constant 128 : index
    %30 = vector.load %arg3[%c0_14, %c128_15] : memref<8x256xf32, #tpu.memory_space<vmem>>, vector<8x128xf32>
    tpu.vector_store %arg3[%c0_14, %c128_15], %18 {strides = array<i32>} : memref<8x256xf32, #tpu.memory_space<vmem>>, vector<8x128xf32>,
    return
  }
  func.func @transform_0(%arg0: i32) -> (i32, i32) {
    %c0_i32 = arith.constant 0 : i32
    %c0_i32_0 = arith.constant 0 : i32
    return %arg0, %c0_i32 : i32, i32
  }
  func.func @transform_1(%arg0: i32) -> (i32, i32) {
    %c0_i32 = arith.constant 0 : i32
    %c0_i32_0 = arith.constant 0 : i32
    %c0_i32_1 = arith.constant 0 : i32
    return %c0_i32, %c0_i32_0 : i32, i32
  }
  func.func @transform_2(%arg0: i32) -> (i32, i32) {
    %c0_i32 = arith.constant 0 : i32
    %c0_i32_0 = arith.constant 0 : i32
    return %arg0, %c0_i32 : i32, i32
  }
}

</mosaic_0001>

<llo_original>
// kernel: tvae_classifier_forward.1
$region0: #{tvae_classifier_forward.1}
  #allocation0 [shape = 'u32[]', space=smem, size = 0x4, offset = 0x4, fixed_abs, tag = 'smem constant byte address 0x4 - core index']
  #allocation1 [shape = 'u32[72,128]{1,0:T(1,128)}', space=vmem, size = 0x9000, scoped, tag = 'internal scratch']
  %s0 = inlined_call_operand.vmem [shape: f32[8,64], index: 0, kind: input, shape index: {}]
  %s1 = inlined_call_operand.hbm [shape: f32[168,128], index: 1, kind: input, shape index: {}]
  %s2 = inlined_call_operand.vmem [shape: f32[8,256], index: 2, kind: output, shape index: {}]
  %s3 = sld [smem:[#allocation0]]
  $region22: #{tvae_classifier_forward.1} parent=0
    _
  %s5 = ssub.s32 1, %s3
  %s6 = scalar_select 0, %s5, %s3
  $region1: #{tvae_classifier_forward.1} parent=0
    #allocation2 [shape = 'u8[86016]{0}', space=vmem, size = 0x15000, scoped, tag = 'input window, operand 1, single buffered']
    #allocation3 [shape = 's32[1]{0}', space=sflag, size = 0x4, scoped, tag = 'scoped memory for tvae_classifier_forward.1']
    %7 = vsyncpa [#allocation3], 0
    // Predicated region
    $region2: #{tvae_classifier_forward.1} parent=1 // pred_check
      _
    $region3: #{tvae_classifier_forward.1} parent=1 // pred_check_branch
      %9 = sbr.rel (0) target = $region5
    $region4: #{tvae_classifier_forward.1} parent=1 // pred_region
      _
    $region5: #{tvae_classifier_forward.1} parent=1 // pred_fallthru
      _
    // Predicated region
    $region6: #{tvae_classifier_forward.1} parent=1 // pred_check
      _
    $region7: #{tvae_classifier_forward.1} parent=1 // pred_check_branch
      %11 = sbr.rel (0) target = $region9
    $region8: #{tvae_classifier_forward.1} parent=1 // pred_region
      %13 = vsyncadd [#allocation3], 0
      %s14 = sshll.u32 %s1, 4
      %s15 = int_to_ptr.hbm [resolvable:$true] %s14
      %s16 = sshll.u32 [#allocation2], 4
      %s17 = int_to_ptr.vmem [resolvable:$true] %s16
      %22 = dma.hbm_to_vmem [thread:$0]  %s15, 2688, %s17, [#allocation3], 128, 128, 8
    $region9: #{tvae_classifier_forward.1} parent=1 // pred_fallthru
      _
    // Predicated region
    $region10: #{tvae_classifier_forward.1} parent=1 // pred_check
      _
    $region11: #{tvae_classifier_forward.1} parent=1 // pred_check_branch
      %24 = sbr.rel (0) target = $region13
    $region12: #{tvae_classifier_forward.1} parent=1 // pred_region
      %26 = dma.done [#allocation3], 2688
    $region13: #{tvae_classifier_forward.1} parent=1 // pred_fallthru
      _
    %v27 = vld [vmem:[%s0] sm:$0xff]
    %v28 = vld [vmem:[#allocation2] sm:$0xff]
    %v29 = vld [vmem:[#allocation2 + $0x8] sm:$0xff]
    %v30 = vld [vmem:[#allocation2 + $0x10] sm:$0xff]
    %v31 = vld [vmem:[#allocation2 + $0x18] sm:$0xff]
    %v32 = vld [vmem:[#allocation2 + $0x20] sm:$0xff]
    %v33 = vld [vmem:[#allocation2 + $0x28] sm:$0xff]
    %v34 = vld [vmem:[#allocation2 + $0x30] sm:$0xff]
    %v35 = vld [vmem:[#allocation2 + $0x38] sm:$0xff]
    %v36 = vld [vmem:[#allocation2 + $0x40] sm:$0xff]
    %v37 = vld [vmem:[#allocation2 + $0x48] sm:$0xff]
    %v38 = vld [vmem:[#allocation2 + $0x50] sm:$0xff]
    %v39 = vld [vmem:[#allocation2 + $0x58] sm:$0xff]
    %v40 = vld [vmem:[#allocation2 + $0x60] sm:$0xff]
    %v41 = vld [vmem:[#allocation2 + $0x68] sm:$0xff]
    %v42 = vld [vmem:[#allocation2 + $0x70] sm:$0xff]
    %v43 = vld [vmem:[#allocation2 + $0x78] sm:$0xff]
    %v44 = vld [vmem:[#allocation2 + $0x80] sm:$0xff]
    %v45 = vld [vmem:[#allocation2 + $0x88] sm:$0xff]
    %v46 = vld [vmem:[#allocation2 + $0x90] sm:$0xff]
    %v47 = vld [vmem:[#allocation2 + $0x98] sm:$0xff]
    %v48 = vld [vmem:[#allocation2 + $0xa0] sm:$0xff]
    %v49 = vperm.slane %v48, 0
    %vm50 = vcmask 523264
    %v52 = vsel %vm50, %v27, 0
    %54 = vmatpush.msra.mxu0 0.0
    %55 = vmatpush.msra.mxu0 0.0
    %56 = vmatpush.msra.mxu0 0.0
    %57 = vmatpush.msra.mxu0 0.0
    %58 = vmatpush.msra.mxu0 0.0
    %59 = vmatpush.msra.mxu0 0.0
    %60 = vmatpush.msra.mxu0 0.0
    %61 = vmatpush.msra.mxu0 0.0
    %62 = vmatpush.msra.mxu0 %v35
    %63 = vmatpush.msra.mxu0 %v34
    %64 = vmatpush.msra.mxu0 %v33
    %65 = vmatpush.msra.mxu0 %v32
    %66 = vmatpush.msra.mxu0 %v31
    %67 = vmatpush.msra.mxu0 %v30
    %68 = vmatpush.msra.mxu0 %v29
    %69 = vmatpush.msra.mxu0 %v28
    %70 = vmatmul.f32.gmra.mxu0 %v52
    %v71 = vpop.f32.mrf.mxu0
    %v72 = vadd.f32 %v49, %v71
    %73 = vdwg.mxu0
    %v74 = vmax.f32 %v72, 0.0
    %v75 = vperm.slane %v48, 1
    %vm76 = vcmask 261120
    %v78 = vsel %vm76, %v74, 0
    %80 = vmatpush.msra.mxu0 0.0
    %81 = vmatpush.msra.mxu0 0.0
    %82 = vmatpush.msra.mxu0 0.0
    %83 = vmatpush.msra.mxu0 0.0
    %84 = vmatpush.msra.mxu0 0.0
    %85 = vmatpush.msra.mxu0 0.0
    %86 = vmatpush.msra.mxu0 0.0
    %87 = vmatpush.msra.mxu0 0.0
    %88 = vmatpush.msra.mxu0 0.0
    %89 = vmatpush.msra.mxu0 0.0
    %90 = vmatpush.msra.mxu0 0.0
    %91 = vmatpush.msra.mxu0 0.0
    %92 = vmatpush.msra.mxu0 %v39
    %93 = vmatpush.msra.mxu0 %v38
    %94 = vmatpush.msra.mxu0 %v37
    %95 = vmatpush.msra.mxu0 %v36
    %96 = vmatmul.f32.gmra.mxu0 %v78
    %v97 = vpop.f32.mrf.mxu0
    %v98 = vadd.f32 %v75, %v97
    %99 = vdwg.mxu0
    %v100 = vperm.slane %v48, 2
    %v102 = vsel %vm76, %v98, 0
    %104 = vmatpush.msra.mxu0 0.0
    %105 = vmatpush.msra.mxu0 0.0
    %106 = vmatpush.msra.mxu0 0.0
    %107 = vmatpush.msra.mxu0 0.0
    %108 = vmatpush.msra.mxu0 0.0
    %109 = vmatpush.msra.mxu0 0.0
    %110 = vmatpush.msra.mxu0 0.0
    %111 = vmatpush.msra.mxu0 0.0
    %112 = vmatpush.msra.mxu0 0.0
    %113 = vmatpush.msra.mxu0 0.0
    %114 = vmatpush.msra.mxu0 0.0
    %115 = vmatpush.msra.mxu0 0.0
    %116 = vmatpush.msra.mxu0 %v43
    %117 = vmatpush.msra.mxu0 %v42
    %118 = vmatpush.msra.mxu0 %v41
    %119 = vmatpush.msra.mxu0 %v40
    %120 = vmatmul.f32.gmra.mxu0 %v102
    %v121 = vpop.f32.mrf.mxu0
    %v122 = vadd.f32 %v100, %v121
    %123 = vdwg.mxu0
    %v124 = vmax.f32 %v122, 0.0
    %v125 = vperm.slane %v48, 3
    %v127 = vsel %vm76, %v124, 0
    %129 = vmatpush.msra.mxu0 0.0
    %130 = vmatpush.msra.mxu0 0.0
    %131 = vmatpush.msra.mxu0 0.0
    %132 = vmatpush.msra.mxu0 0.0
    %133 = vmatpush.msra.mxu0 0.0
    %134 = vmatpush.msra.mxu0 0.0
    %135 = vmatpush.msra.mxu0 0.0
    %136 = vmatpush.msra.mxu0 0.0
    %137 = vmatpush.msra.mxu0 0.0
    %138 = vmatpush.msra.mxu0 0.0
    %139 = vmatpush.msra.mxu0 0.0
    %140 = vmatpush.msra.mxu0 0.0
    %141 = vmatpush.msra.mxu0 %v47
    %142 = vmatpush.msra.mxu0 %v46
    %143 = vmatpush.msra.mxu0 %v45
    %144 = vmatpush.msra.mxu0 %v44
    %145 = vmatmul.f32.gmra.mxu0 %v127
    %v146 = vpop.f32.mrf.mxu0
    %v147 = vadd.f32 %v125, %v146
    %148 = vdwg.mxu0
    %149 = vst [vmem:[%s2] sm:$0xff] %v147
    %150 = vst [vmem:[%s2 + $0x8] sm:$0xff] %v98
    // Predicated region
    $region14: #{tvae_classifier_forward.1} parent=1 // pred_check
      _
    $region15: #{tvae_classifier_forward.1} parent=1 // pred_check_branch
      %152 = sbr.rel (0) target = $region17
    $region16: #{tvae_classifier_forward.1} parent=1 // pred_region
      _
    $region17: #{tvae_classifier_forward.1} parent=1 // pred_fallthru
      _
    // Predicated region
    $region18: #{tvae_classifier_forward.1} parent=1 // pred_check
      _
    $region19: #{tvae_classifier_forward.1} parent=1 // pred_check_branch
      %154 = sbr.rel (0) target = $region21
    $region20: #{tvae_classifier_forward.1} parent=1 // pred_region
      _
    $region21: #{tvae_classifier_forward.1} parent=1 // pred_fallthru
      _
    %155 = vsyncpa [#allocation3], 1

</llo_original>
